<compile_context>
chip_gen: v7x
topology: tpu7x:2x2x1
jax: 0.10.0
libtpu: 0.0.40
codegen_flags: <defaults>
</compile_context>

<pallas_src>
import jax
import jax.numpy as jnp
from jax.experimental import pallas as pl
from jax.experimental.pallas import tpu as pltpu


def _round_up(v: int, m: int) -> int:
    return ((v + m - 1) // m) * m


def _generator_kernel(x_ref, wt_ref, b_ref, o_ref):
    # x_ref : (tm, nh)   row tile of the flattened input (compute dtype, e.g. bf16)
    # wt_ref: (nh, V)    transposed Linear weight, resident across grid steps
    # b_ref : (1, V)     bias (f32), resident across grid steps
    # o_ref : (tm, V)    log-softmax output tile
    logits = (
        jnp.dot(x_ref[...], wt_ref[...], preferred_element_type=jnp.float32)
        + b_ref[...]
    )
    m = jnp.max(logits, axis=-1, keepdims=True)
    shifted = logits - m
    lse = jnp.log(jnp.sum(jnp.exp(shifted), axis=-1, keepdims=True))
    o_ref[...] = (shifted - lse).astype(o_ref.dtype)


def prepare_generator_params(w: jnp.ndarray,
                             b: jnp.ndarray,
                             *,
                             compute_dtype=jnp.bfloat16):
    """One-time parameter prep (call at load time, NOT per forward).

    w: (V, nh) torch nn.Linear layout; b: (V,).
    Returns wt: (nh, V) in compute_dtype, b2: (1, V) f32.
    """
    V, nh = w.shape
    assert b.shape == (V,)
    wt = jnp.transpose(w).astype(compute_dtype)
    b2 = b.reshape(1, V).astype(jnp.float32)
    return wt, b2


def generator_forward(x: jnp.ndarray,
                      wt: jnp.ndarray,
                      b2: jnp.ndarray,
                      *,
                      block_rows: int = 256) -> jnp.ndarray:
    """x: (..., nh); wt: (nh, V) pre-transposed weight; b2: (1, V) -> (..., V)."""
    *lead, nh = x.shape
    nh_w, V = wt.shape
    assert nh_w == nh, "weight/input hidden-size mismatch"
    assert b2.shape == (1, V)

    M = 1
    for d in lead:
        M *= d
    if M == 0:
        return jnp.zeros((*lead, V), dtype=x.dtype)

    # Flatten leading dims -> lane-dense (M, nh); cast to the MXU compute dtype.
    x2 = x.reshape(M, nh).astype(wt.dtype)

    # --- Row-tile sizing -----------------------------------------------------
    if M <= block_rows:
        # Split into >= 2 row tiles (when M > 8) so both v7x TensorCores get work.
        tm = _round_up(max((M + 1) // 2, 1), 8)
    else:
        tm = max(8, (block_rows // 8) * 8)

    itemsize_x = x2.dtype.itemsize
    itemsize_w = wt.dtype.itemsize
    itemsize_o = jnp.dtype(x.dtype).itemsize

    try:
        vmem_cap = int(pltpu.get_tpu_info().vmem_capacity_bytes)
    except Exception:
        vmem_cap = 64 * 1024 * 1024  # conservative: v7x per-TensorCore

    def _vmem_need(tm_: int) -> int:
        return (2 * tm_ * nh * itemsize_x      # double-buffered x tile
                + nh * V * itemsize_w          # resident W^T (Buffered(1))
                + 8 * V * 4                    # resident bias (sublane-padded)
                + 2 * tm_ * V * itemsize_o)    # double-buffered output tile

    # Shrink the row tile if the footprint doesn't fit this chip's VMEM,
    # but keep per-step output large enough to stay near the HBM roofline.
    while tm > 64 and _vmem_need(tm) > int(0.7 * vmem_cap):
        tm = max(64, _round_up(tm // 2, 8))

    n_tiles = pl.cdiv(M, tm)
    vmem_limit = int(min(max(_vmem_need(tm) * 1.5, 8 << 20), 0.75 * vmem_cap))

    cost = pl.CostEstimate(
        flops=2 * M * nh * V,
        transcendentals=M * V,
        bytes_accessed=M * nh * itemsize_x + nh * V * itemsize_w
        + V * 4 + M * V * itemsize_o,
    )

    def _call(single_buffer_resident: bool):
        resident_kwargs = (
            dict(pipeline_mode=pl.Buffered(1)) if single_buffer_resident else {}
        )
        return pl.pallas_call(
            _generator_kernel,
            out_shape=jax.ShapeDtypeStruct((M, V), x.dtype),
            grid_spec=pltpu.PrefetchScalarGridSpec(
                num_scalar_prefetch=0,
                grid=(n_tiles,),
                in_specs=[
                    # row tile of x (pipelined, double-buffered)
                    pl.BlockSpec((tm, nh), lambda i: (i, 0)),
                    # W^T: same block every step -> resident, single-buffered
                    pl.BlockSpec((nh, V), lambda i: (0, 0), **resident_kwargs),
                    # bias: same block every step -> resident, single-buffered
                    pl.BlockSpec((1, V), lambda i: (0, 0), **resident_kwargs),
                ],
                out_specs=pl.BlockSpec((tm, V), lambda i: (i, 0)),
            ),
            compiler_params=pltpu.CompilerParams(
                dimension_semantics=("parallel",),
                vmem_limit_bytes=vmem_limit,
            ),
            cost_estimate=cost,
        )(x2, wt, b2)

    try:
        out = _call(True)
    except Exception:
        # Fallback if this Pallas build rejects Buffered(1) on resident operands.
        out = _call(False)

    return out.reshape(*lead, V)


if __name__ == "__main__":
    # Small shapes consistent with the module: batch=2, seq=8, nh=32, vocab=128.
    B, L, NH, VOCAB = 2, 8, 32, 128

    key = jax.random.PRNGKey(0)
    kx, kw, kb = jax.random.split(key, 3)
    x = jax.random.normal(kx, (B, L, NH), dtype=jnp.float32)
    # Parameters emulating nn.Linear(nh, vocab_size) init (deterministic here).
    w = jax.random.normal(kw, (VOCAB, NH), dtype=jnp.float32) * (1.0 / NH ** 0.5)
    b = jax.random.normal(kb, (VOCAB,), dtype=jnp.float32) * 0.01

    # Reference: plain-JAX version of the torch forward (f32).
    ref = jax.nn.log_softmax(jnp.einsum("bln,vn->blv", x, w) + b, axis=-1)

    # Default (bf16 MXU inputs, f32 accumulation) — hoisted one-time param prep.
    wt, b2 = prepare_generator_params(w, b)
    y = generator_forward(x, wt, b2)
    jax.block_until_ready(y)
    assert y.shape == (B, L, VOCAB)
    assert jnp.allclose(y, ref, atol=5e-2, rtol=1e-2), "bf16 path mismatch vs reference"

    # f32 compute path: tight tolerance sanity check of the kernel math.
    wt32, b232 = prepare_generator_params(w, b, compute_dtype=jnp.float32)
    y32 = generator_forward(x, wt32, b232)
    jax.block_until_ready(y32)
    assert jnp.allclose(y32, ref, atol=1e-5, rtol=1e-5), "f32 path mismatch vs reference"

    print("KERNEL_OK")
</pallas_src>

<mosaic_0001>
module attributes {stable_mosaic.version = 11 : i64} {
  func.func @_generator_kernel(%arg0: i32, %arg1: memref<8x32xbf16, #tpu.memory_space<vmem>>, %arg2: memref<32x128xbf16, #tpu.memory_space<vmem>>, %arg3: memref<1x128xf32, #tpu.memory_space<vmem>>, %arg4: memref<8x128xf32, #tpu.memory_space<vmem>>) attributes {dimension_semantics = [#tpu.dimension_semantics<parallel>], iteration_bounds = array<i64: 2>, scalar_prefetch = 0 : i64, scratch_operands = 0 : i64, tpu.core_type = #tpu.core_type<tc>, window_params = [{transform_indices = @transform_0, window_bounds = array<i64: 8, 32>}, {pipeline_mode = #tpu.pipeline_mode<synchronous>, transform_indices = @transform_1, window_bounds = array<i64: 32, 128>}, {pipeline_mode = #tpu.pipeline_mode<synchronous>, transform_indices = @transform_2, window_bounds = array<i64: 1, 128>}, {transform_indices = @transform_3, window_bounds = array<i64: 8, 128>}]} {
    %c0 = arith.constant 0 : index
    %c0_0 = arith.constant 0 : index
    %0 = vector.load %arg1[%c0, %c0_0] : memref<8x32xbf16, #tpu.memory_space<vmem>>, vector<8x32xbf16>
    %c0_1 = arith.constant 0 : index
    %c0_2 = arith.constant 0 : index
    %1 = vector.load %arg2[%c0_1, %c0_2] : memref<32x128xbf16, #tpu.memory_space<vmem>>, vector<32x128xbf16>
    %cst = arith.constant dense<0.000000e+00> : vector<8x128xf32>
    %2 = tpu.matmul %0, %1, %cst {dimension_numbers = #tpu.dot_dimension_numbers<[1], [0], [0], [1], [0, 0, 1, 1], [], []>} : vector<8x32xbf16>, vector<32x128xbf16>, vector<8x128xf32> -> vector<8x128xf32>
    %c0_3 = arith.constant 0 : index
    %c0_4 = arith.constant 0 : index
    %3 = vector.load %arg3[%c0_3, %c0_4] : memref<1x128xf32, #tpu.memory_space<vmem>>, vector<1x128xf32>
    %4 = vector.broadcast %3 : vector<1x128xf32> to vector<8x128xf32>
    %5 = arith.addf %2, %4 : vector<8x128xf32>
    %cst_5 = arith.constant dense<0xFF800000> : vector<8xf32>
    %6 = vector.multi_reduction <maximumf>, %5, %cst_5 [1] : vector<8x128xf32> to vector<8xf32>
    %7 = vector.shape_cast %6 : vector<8xf32> to vector<8x1xf32>
    %8 = vector.broadcast %7 : vector<8x1xf32> to vector<8x128xf32>
    %9 = arith.subf %5, %8 : vector<8x128xf32>
    %10 = math.exp %9 : vector<8x128xf32>
    %cst_6 = arith.constant dense<0.000000e+00> : vector<8xf32>
    %11 = vector.multi_reduction <add>, %10, %cst_6 [1] : vector<8x128xf32> to vector<8xf32>
    %12 = vector.shape_cast %11 : vector<8xf32> to vector<8x1xf32>
    %13 = math.log %12 : vector<8x1xf32>
    %14 = vector.broadcast %13 : vector<8x1xf32> to vector<8x128xf32>
    %15 = arith.subf %9, %14 : vector<8x128xf32>
    %c0_7 = arith.constant 0 : index
    %c0_8 = arith.constant 0 : index
    %16 = vector.load %arg4[%c0_7, %c0_8] : memref<8x128xf32, #tpu.memory_space<vmem>>, vector<8x128xf32>
    tpu.vector_store %arg4[%c0_7, %c0_8], %15 {strides = array<i32>} : memref<8x128xf32, #tpu.memory_space<vmem>>, vector<8x128xf32>,
    return
  }
  func.func @transform_0(%arg0: i32) -> (i32, i32) {
    %c0_i32 = arith.constant 0 : i32
    %c0_i32_0 = arith.constant 0 : i32
    return %arg0, %c0_i32 : i32, i32
  }
  func.func @transform_1(%arg0: i32) -> (i32, i32) {
    %c0_i32 = arith.constant 0 : i32
    %c0_i32_0 = arith.constant 0 : i32
    %c0_i32_1 = arith.constant 0 : i32
    return %c0_i32, %c0_i32_0 : i32, i32
  }
  func.func @transform_2(%arg0: i32) -> (i32, i32) {
    %c0_i32 = arith.constant 0 : i32
    %c0_i32_0 = arith.constant 0 : i32
    %c0_i32_1 = arith.constant 0 : i32
    return %c0_i32, %c0_i32_0 : i32, i32
  }
  func.func @transform_3(%arg0: i32) -> (i32, i32) {
    %c0_i32 = arith.constant 0 : i32
    %c0_i32_0 = arith.constant 0 : i32
    return %arg0, %c0_i32 : i32, i32
  }
}

module attributes {stable_mosaic.version = 11 : i64} {
  func.func @_generator_kernel(%arg0: i32, %arg1: memref<8x32xbf16, #tpu.memory_space<vmem>>, %arg2: memref<32x128xbf16, #tpu.memory_space<vmem>>, %arg3: memref<1x128xf32, #tpu.memory_space<vmem>>, %arg4: memref<8x128xf32, #tpu.memory_space<vmem>>) attributes {dimension_semantics = [#tpu.dimension_semantics<parallel>], iteration_bounds = array<i64: 2>, scalar_prefetch = 0 : i64, scratch_operands = 0 : i64, tpu.core_type = #tpu.core_type<tc>, window_params = [{transform_indices = @transform_0, window_bounds = array<i64: 8, 32>}, {pipeline_mode = #tpu.pipeline_mode<synchronous>, transform_indices = @transform_1, window_bounds = array<i64: 32, 128>}, {pipeline_mode = #tpu.pipeline_mode<synchronous>, transform_indices = @transform_2, window_bounds = array<i64: 1, 128>}, {transform_indices = @transform_3, window_bounds = array<i64: 8, 128>}]} {
    %c0 = arith.constant 0 : index
    %c0_0 = arith.constant 0 : index
    %0 = vector.load %arg1[%c0, %c0_0] : memref<8x32xbf16, #tpu.memory_space<vmem>>, vector<8x32xbf16>
    %c0_1 = arith.constant 0 : index
    %c0_2 = arith.constant 0 : index
    %1 = vector.load %arg2[%c0_1, %c0_2] : memref<32x128xbf16, #tpu.memory_space<vmem>>, vector<32x128xbf16>
    %cst = arith.constant dense<0.000000e+00> : vector<8x128xf32>
    %2 = tpu.matmul %0, %1, %cst {dimension_numbers = #tpu.dot_dimension_numbers<[1], [0], [0], [1], [0, 0, 1, 1], [], []>} : vector<8x32xbf16>, vector<32x128xbf16>, vector<8x128xf32> -> vector<8x128xf32>
    %c0_3 = arith.constant 0 : index
    %c0_4 = arith.constant 0 : index
    %3 = vector.load %arg3[%c0_3, %c0_4] : memref<1x128xf32, #tpu.memory_space<vmem>>, vector<1x128xf32>
    %4 = vector.broadcast %3 : vector<1x128xf32> to vector<8x128xf32>
    %5 = arith.addf %2, %4 : vector<8x128xf32>
    %cst_5 = arith.constant dense<0xFF800000> : vector<8xf32>
    %6 = vector.multi_reduction <maximumf>, %5, %cst_5 [1] : vector<8x128xf32> to vector<8xf32>
    %7 = vector.shape_cast %6 : vector<8xf32> to vector<8x1xf32>
    %8 = vector.broadcast %7 : vector<8x1xf32> to vector<8x128xf32>
    %9 = arith.subf %5, %8 : vector<8x128xf32>
    %10 = math.exp %9 : vector<8x128xf32>
    %cst_6 = arith.constant dense<0.000000e+00> : vector<8xf32>
    %11 = vector.multi_reduction <add>, %10, %cst_6 [1] : vector<8x128xf32> to vector<8xf32>
    %12 = vector.shape_cast %11 : vector<8xf32> to vector<8x1xf32>
    %13 = math.log %12 : vector<8x1xf32>
    %14 = vector.broadcast %13 : vector<8x1xf32> to vector<8x128xf32>
    %15 = arith.subf %9, %14 : vector<8x128xf32>
    %c0_7 = arith.constant 0 : index
    %c0_8 = arith.constant 0 : index
    %16 = vector.load %arg4[%c0_7, %c0_8] : memref<8x128xf32, #tpu.memory_space<vmem>>, vector<8x128xf32>
    tpu.vector_store %arg4[%c0_7, %c0_8], %15 {strides = array<i32>} : memref<8x128xf32, #tpu.memory_space<vmem>>, vector<8x128xf32>,
    return
  }
  func.func @transform_0(%arg0: i32) -> (i32, i32) {
    %c0_i32 = arith.constant 0 : i32
    %c0_i32_0 = arith.constant 0 : i32
    return %arg0, %c0_i32 : i32, i32
  }
  func.func @transform_1(%arg0: i32) -> (i32, i32) {
    %c0_i32 = arith.constant 0 : i32
    %c0_i32_0 = arith.constant 0 : i32
    %c0_i32_1 = arith.constant 0 : i32
    return %c0_i32, %c0_i32_0 : i32, i32
  }
  func.func @transform_2(%arg0: i32) -> (i32, i32) {
    %c0_i32 = arith.constant 0 : i32
    %c0_i32_0 = arith.constant 0 : i32
    %c0_i32_1 = arith.constant 0 : i32
    return %c0_i32, %c0_i32_0 : i32, i32
  }
  func.func @transform_3(%arg0: i32) -> (i32, i32) {
    %c0_i32 = arith.constant 0 : i32
    %c0_i32_0 = arith.constant 0 : i32
    return %arg0, %c0_i32 : i32, i32
  }
}

</mosaic_0001>

<llo_original>
// kernel: tpu_custom_call.1
$region0: #{tpu_custom_call.1}
  #allocation0 [shape = 'u32[]', space=smem, size = 0x4, offset = 0x4, fixed_abs, tag = 'smem constant byte address 0x4 - core index']
  #allocation1 [shape = 'u32[144,128]{1,0:T(1,128)}', space=vmem, size = 0x12000, scoped, tag = 'internal scratch']
  %s0 = inlined_call_operand.hbm [shape: bf16[16,32], index: 0, kind: input, shape index: {}]
  %s1 = inlined_call_operand.hbm [shape: bf16[32,128], index: 1, kind: input, shape index: {}]
  %s2 = inlined_call_operand.vmem [shape: f32[1,128], index: 2, kind: input, shape index: {}]
  %s3 = inlined_call_operand.hbm [shape: f32[16,128], index: 3, kind: output, shape index: {}]
  %s4 = sld [smem:[#allocation0]]
  $region53: #{tpu_custom_call.1} parent=0
    _
  %s6 = ssub.s32 1, %s4
  %s7 = scalar_select 0, %s6, %s4
  $region1: #{tpu_custom_call.1} parent=0
    #allocation2 [shape = 'u8[4096]{0}', space=vmem, size = 0x1000, scoped, tag = 'input window, operand 0']
    #allocation3 [shape = 's32[2]{0}', space=sflag, size = 0x8, scoped, tag = 'scoped memory for tpu_custom_call.1']
    #allocation4 [shape = 's32[2]{0}', space=sflag, size = 0x8, scoped, tag = 'scoped memory for tpu_custom_call.1']
    #allocation5 [shape = 'u8[8192]{0}', space=vmem, size = 0x2000, scoped, tag = 'input window, operand 1, single buffered']
    #allocation6 [shape = 's32[1]{0}', space=sflag, size = 0x4, scoped, tag = 'scoped memory for tpu_custom_call.1']
    #allocation7 [shape = 'u8[8192]{0}', space=vmem, size = 0x2000, scoped, tag = 'output window, operand 0']
    %8 = vsyncpa [#allocation3], 0
    %s9 = scalar_lea.sflag [#allocation3], 1
    %10 = vsyncpa %s9, 0
    %11 = vsyncpa [#allocation6], 0
    %12 = vsyncpa [#allocation4], 0
    %s13 = scalar_lea.sflag [#allocation4], 1
    %14 = vsyncpa %s13, 0
    loop: start=0, step=1, limit=4
    $region2: #{tpu_custom_call.1} parent=1 // loop_pre_header
      _
    $region3: #{tpu_custom_call.1} parent=1 // loop_header
      %s16 = sphi 0, %s20
      %p17 = scmp.ge.s32.totalorder %s16, 4
      %s26 = sphi 0, %s28
      %s29 = sphi 0, %s26
      %s30 = sphi 0, %s29
      %s46 = sphi 0, %s30
      %s50 = sphi 0, %s50
      %s52 = sphi 0, %s50
      %s53 = sphi 0, %s52
      %s67 = sphi 0, %s53
      %s71 = sphi 0, %s71
      %s73 = sphi 0, %s71
      %s74 = sphi 0, %s73
      %s88 = sphi 0, %s74
      %s94 = sphi 0, %s96
      %s97 = sphi 0, %s94
      %s98 = sphi 0, %s97
      %s114 = sphi 0, %s98
    $region4: #{tpu_custom_call.1} parent=1 // loop_header_branch
      %19 = sbr.rel (%p17) target = $region8
    $region5: #{tpu_custom_call.1} parent=1 // loop_body
      %s21 = ssub.s32 %s16, 1
      %s22 = ssub.s32 %s16, 2
      %s23 = sadd.s32 %s16, 1
      %s24 = ssub.s32 %s16, %s23
      %p25 = scmp.eq.s32.totalorder %s24, 0
      %s27 = sadd.s32 %s26, 1
      %s28 = scalar_select %p25, %s26, %s27
      %p31 = pneg %p25
      %p32 = scmp.eq.s32.totalorder %s16, 1
      %p33 = por %p31, %p32
      %p34 = scmp.ne.s32.totalorder %s26, %s29
      %p35 = scmp.eq.s32.totalorder %s16, 0
      %p36 = por %p34, %p35
      %p37 = scmp.ne.s32.totalorder %s26, %s29
      %p38 = scmp.eq.s32.totalorder %s21, 1
      %p39 = por %p37, %p38
      %p40 = scmp.ne.s32.totalorder %s29, %s30
      %p41 = scmp.eq.s32.totalorder %s21, 0
      %p42 = por %p40, %p41
      %p43 = scmp.ne.s32.totalorder %s29, %s30
      %p44 = scmp.eq.s32.totalorder %s22, 1
      %p45 = por %p43, %p44
      %p47 = scmp.ne.s32.totalorder %s30, %s46
      %p48 = scmp.eq.s32.totalorder %s22, 0
      %p49 = por %p47, %p48
      %s51 = sadd.s32 %s50, 1
      %p54 = scmp.eq.s32.totalorder %s16, 1
      %p55 = scmp.ne.s32.totalorder %s50, %s52
      %p56 = scmp.eq.s32.totalorder %s16, 0
      %p57 = por %p55, %p56
      %p58 = scmp.ne.s32.totalorder %s50, %s52
      %p59 = scmp.eq.s32.totalorder %s21, 1
      %p60 = por %p58, %p59
      %p61 = scmp.ne.s32.totalorder %s52, %s53
      %p62 = scmp.eq.s32.totalorder %s21, 0
      %p63 = por %p61, %p62
      %p64 = scmp.ne.s32.totalorder %s52, %s53
      %p65 = scmp.eq.s32.totalorder %s22, 1
      %p66 = por %p64, %p65
      %p68 = scmp.ne.s32.totalorder %s53, %s67
      %p69 = scmp.eq.s32.totalorder %s22, 0
      %p70 = por %p68, %p69
      %s72 = sadd.s32 %s71, 1
      %p75 = scmp.eq.s32.totalorder %s16, 1
      %p76 = scmp.ne.s32.totalorder %s71, %s73
      %p77 = scmp.eq.s32.totalorder %s16, 0
      %p78 = por %p76, %p77
      %p79 = scmp.ne.s32.totalorder %s71, %s73
      %p80 = scmp.eq.s32.totalorder %s21, 1
      %p81 = por %p79, %p80
      %p82 = scmp.ne.s32.totalorder %s73, %s74
      %p83 = scmp.eq.s32.totalorder %s21, 0
      %p84 = por %p82, %p83
      %p85 = scmp.ne.s32.totalorder %s73, %s74
      %p86 = scmp.eq.s32.totalorder %s22, 1
      %p87 = por %p85, %p86
      %p89 = scmp.ne.s32.totalorder %s74, %s88
      %p90 = scmp.eq.s32.totalorder %s22, 0
      %p91 = por %p89, %p90
      %s92 = ssub.s32 %s16, %s23
      %p93 = scmp.eq.s32.totalorder %s92, 0
      %s95 = sadd.s32 %s94, 1
      %s96 = scalar_select %p93, %s94, %s95
      %p99 = pneg %p93
      %p100 = scmp.eq.s32.totalorder %s16, 1
      %p101 = por %p99, %p100
      %p102 = scmp.ne.s32.totalorder %s94, %s97
      %p103 = scmp.eq.s32.totalorder %s16, 0
      %p104 = por %p102, %p103
      %p105 = scmp.ne.s32.totalorder %s94, %s97
      %p106 = scmp.eq.s32.totalorder %s21, 1
      %p107 = por %p105, %p106
      %p108 = scmp.ne.s32.totalorder %s97, %s98
      %p109 = scmp.eq.s32.totalorder %s21, 0
      %p110 = por %p108, %p109
      %p111 = scmp.ne.s32.totalorder %s97, %s98
      %p112 = scmp.eq.s32.totalorder %s22, 1
      %p113 = por %p111, %p112
      %p115 = scmp.ne.s32.totalorder %s98, %s114
      %p116 = scmp.eq.s32.totalorder %s22, 0
      %p117 = por %p115, %p116
      %p118 = scmp.le.s32.totalorder 1, %s16
      %p119 = scmp.lt.s32.totalorder %s16, 3
      %p120 = pnand %p118, %p119
      %p121 = pneg %p120
      // Predicated region
      $region9: #{tpu_custom_call.1} parent=5 // pred_check
        _
      $region10: #{tpu_custom_call.1} parent=5 // pred_check_branch
        %123 = sbr.rel (%p120) target = $region12
      $region11: #{tpu_custom_call.1} parent=5 // pred_region
        %s124 = ssub.s32 %s16, 1
        // Predicated region
        $region13: #{tpu_custom_call.1} parent=11 // pred_check
          %p125 = pneg %p63
        $region14: #{tpu_custom_call.1} parent=11 // pred_check_branch
          %127 = sbr.rel (%p125) target = $region16
        $region15: #{tpu_custom_call.1} parent=11 // pred_region
          %s129 = ssub.s32 256, 256
          %130 = vsyncadd [#allocation6], %s129
          %s131 = sshll.u32 [#allocation5], 4
          %s132 = int_to_ptr.vmem [resolvable:$true] %s131
          %137 = dma.hbm_to_vmem [thread:$0]  %s1, 256, %s132, [#allocation6], 64, 64, 4
        $region16: #{tpu_custom_call.1} parent=11 // pred_fallthru
          _
        // Predicated region
        $region17: #{tpu_custom_call.1} parent=11 // pred_check
          %p138 = pneg %p84
        $region18: #{tpu_custom_call.1} parent=11 // pred_check_branch
          %140 = sbr.rel (%p138) target = $region20
        $region19: #{tpu_custom_call.1} parent=11 // pred_region
          _
        $region20: #{tpu_custom_call.1} parent=11 // pred_fallthru
          _
      $region12: #{tpu_custom_call.1} parent=5 // pred_fallthru
        _
      %p141 = scmp.lt.s32.totalorder %s16, 2
      // Predicated region
      $region21: #{tpu_custom_call.1} parent=5 // pred_check
        %p142 = pneg %p141
      $region22: #{tpu_custom_call.1} parent=5 // pred_check_branch
        %144 = sbr.rel (%p142) target = $region24
      $region23: #{tpu_custom_call.1} parent=5 // pred_region
        // Predicated region
        $region25: #{tpu_custom_call.1} parent=23 // pred_check
          %p145 = pneg %p36
        $region26: #{tpu_custom_call.1} parent=23 // pred_check_branch
          %147 = sbr.rel (%p145) target = $region28
        $region27: #{tpu_custom_call.1} parent=23 // pred_region
          %s148 = sand.u32 %s26, 1
          %s149 = scalar_lea.sflag [#allocation3], %s148
          %s150 = sand.u32 %s26, 1
          %s151 = smul.addr %s150, 4
          %s152 = scalar_lea.vmem [#allocation2], %s151
          %s154 = ssub.s32 64, 64
          %155 = vsyncadd %s149, %s154
          %s156 = smul.addr %s16, 64
          %s157 = scalar_lea.hbm %s0, %s156
          %s159 = sshll.u32 %s152, 4
          %s160 = int_to_ptr.vmem [resolvable:$true] %s159
          %162 = dma.hbm_to_vmem [thread:$0]  %s157, 64, %s160, %s149
        $region28: #{tpu_custom_call.1} parent=23 // pred_fallthru
          _
      $region24: #{tpu_custom_call.1} parent=5 // pred_fallthru
        _
      %p163 = scmp.le.s32.totalorder 1, %s16
      %p164 = scmp.lt.s32.totalorder %s16, 3
      %p165 = pnand %p163, %p164
      %p166 = pneg %p165
      // Predicated region
      $region29: #{tpu_custom_call.1} parent=5 // pred_check
        _
      $region30: #{tpu_custom_call.1} parent=5 // pred_check_branch
        %168 = sbr.rel (%p165) target = $region32
      $region31: #{tpu_custom_call.1} parent=5 // pred_region
        %s169 = ssub.s32 %s16, 1
        %s170 = sand.u32 %s29, 1
        %s171 = scalar_lea.sflag [#allocation3], %s170
        %s172 = sand.u32 %s29, 1
        %s173 = smul.addr %s172, 4
        %s174 = scalar_lea.vmem [#allocation2], %s173
        // Predicated region
        $region33: #{tpu_custom_call.1} parent=31 // pred_check
          %p175 = pneg %p42
        $region34: #{tpu_custom_call.1} parent=31 // pred_check_branch
          %177 = sbr.rel (%p175) target = $region36
        $region35: #{tpu_custom_call.1} parent=31 // pred_region
          %178 = dma.done %s171, 64
        $region36: #{tpu_custom_call.1} parent=31 // pred_fallthru
          _
        // Predicated region
        $region37: #{tpu_custom_call.1} parent=31 // pred_check
          %p179 = pneg %p63
        $region38: #{tpu_custom_call.1} parent=31 // pred_check_branch
          %181 = sbr.rel (%p179) target = $region40
        $region39: #{tpu_custom_call.1} parent=31 // pred_region
          %182 = dma.done [#allocation6], 256
        $region40: #{tpu_custom_call.1} parent=31 // pred_fallthru
          _
        %s183 = sand.u32 %s29, 1
        %s184 = scalar_lea.sflag [#allocation3], %s183
        %s185 = sand.u32 %s29, 1
        %s186 = smul.addr %s185, 4
        %s187 = scalar_lea.vmem [#allocation2], %s186
        %p188 = pneg %p42
        %p189 = pneg %p39
        %p190 = pneg %p63
        %p191 = pneg %p60
        %p192 = pneg %p84
        %p193 = pneg %p81
        %p194 = pneg %p110
        %p195 = pneg %p107
        %s196 = sand.u32 %s97, 1
        %s197 = scalar_lea.sflag [#allocation4], %s196
        %s198 = sand.u32 %s97, 1
        %s199 = smul.addr %s198, 8
        %s200 = scalar_lea.vmem [#allocation7], %s199
        %v202 = vld [vmem:[%s174] sm:$0xf]
        %v203 = vld [vmem:[#allocation5] sm:$0xf]
        %v204 = vld [vmem:[#allocation5 + $0x4] sm:$0xf]
        %v205 = vld [vmem:[#allocation5 + $0x8] sm:$0xf]
        %v206 = vld [vmem:[#allocation5 + $0xc] sm:$0xf]
        %v207 = vld [vmem:[%s2] sm:$0x1]
        %v209 = vlaneseq
        %v210 = vshrl.u32 %v209, 7
        %v211 = vsub.s32 0, %v210
        %v212 = vrot.slane %v207, %v211
        %v218 = vunpack.c.l.b16 %v203
        %v219 = vunpack.c.l.b16 %v204
        %v220 = vunpack.c.l.b16 %v205
        %v221 = vunpack.c.l.b16 %v206
        %v222 = vpack.c.b16 %v219, %v218
        %v223 = vpack.c.b16 %v221, %v220
        %vm226 = vcmask 261120
        %v228 = vsel %vm226, %v202, 0
        %230 = vmatprep.subr.bf16.mxu0 0
        %231 = vmatpush1.bf16.msra.mxu0 %v222
        %232 = vmatprep.subr.bf16.mxu0 0
        %233 = vmatpush1.bf16.msra.mxu0 %v223
        %234 = vmatprep.subr.bf16.mxu0 0
        %235 = vmatpush1.bf16.msra.mxu0 0
        %236 = vmatprep.subr.bf16.mxu0 0
        %237 = vmatpush1.bf16.msra.mxu0 0
        %238 = vmatprep.subr.bf16.mxu0 0
        %239 = vmatpush1.bf16.msra.mxu0 0
        %240 = vmatprep.subr.bf16.mxu0 0
        %241 = vmatpush1.bf16.msra.mxu0 0
        %242 = vmatprep.subr.bf16.mxu0 0
        %243 = vmatpush1.bf16.msra.mxu0 0
        %244 = vmatprep.subr.bf16.mxu0 0
        %245 = vmatpush1.bf16.msra.mxu0 0
        %246 = vmatprep.subr.bf16.mxu0 0
        %247 = vmatpush1.bf16.msra.mxu0 0
        %248 = vmatprep.subr.bf16.mxu0 0
        %249 = vmatpush1.bf16.msra.mxu0 0
        %250 = vmatprep.subr.bf16.mxu0 0
        %251 = vmatpush1.bf16.msra.mxu0 0
        %252 = vmatprep.subr.bf16.mxu0 0
        %253 = vmatpush1.bf16.msra.mxu0 0
        %254 = vmatprep.subr.bf16.mxu0 0
        %255 = vmatpush1.bf16.msra.mxu0 0
        %256 = vmatprep.subr.bf16.mxu0 0
        %257 = vmatpush1.bf16.msra.mxu0 0
        %258 = vmatprep.subr.bf16.mxu0 0
        %259 = vmatpush1.bf16.msra.mxu0 0
        %260 = vmatprep.subr.bf16.mxu0 0
        %261 = vmatpush1.bf16.msra.mxu0 0
        %262 = vmatprep.mubr.bf16.mxu0 0
        %263 = vmatmul.mubr.bf16.gmra.mrb[0].mxu0 %v228
        %v264 = vpop.f32.mrb[0].mxu0
        %v265 = vadd.f32 %v212, %v264
        %v266 = vpop.f32.mrb[0].mxu0
        %v267 = vpop.f32.mrb[0].mxu0
        %v268 = vpop.f32.mrb[0].mxu0
        %269 = vdwg.mxu0
        %270 = vmax.xlane.f32.xlu0 %v265
        %v271 = vpop.xlane.xlu0 %270
        %v272 = vsub.f32 %v265, %v271
        %v273 = vmul.f32 %v272, 1.442695
        %v274 = vpow.pop %v273
        %275 = vadd.xlane.f32.xlu0 %v274
        %v276 = vpop.xlane.xlu0 %275
        %v277 = vlog2.pop %v276
        %v278 = vmul.f32 %v277, 0.6931472
        %v279 = vsub.f32 %v272, %v278
        %280 = vst [vmem:[%s200] sm:$0xff] %v279
        %s281 = sand.u32 %s97, 1
        %s282 = scalar_lea.sflag [#allocation4], %s281
        %s283 = sand.u32 %s97, 1
        %s284 = smul.addr %s283, 8
        %s285 = scalar_lea.vmem [#allocation7], %s284
        // Predicated region
        $region41: #{tpu_custom_call.1} parent=31 // pred_check
          %p286 = pneg %p107
        $region42: #{tpu_custom_call.1} parent=31 // pred_check_branch
          %288 = sbr.rel (%p286) target = $region44
        $region43: #{tpu_custom_call.1} parent=31 // pred_region
          %s290 = ssub.s32 128, 128
          %291 = vsyncadd %s282, %s290
          %s292 = smul.addr %s21, 128
          %s293 = scalar_lea.hbm %s3, %s292
          %s295 = sshll.u32 %s285, 4
          %s296 = int_to_ptr.vmem [resolvable:$true] %s295
          %298 = dma.vmem_to_hbm [thread:$0]  %s296, 128, %s293, %s282
        $region44: #{tpu_custom_call.1} parent=31 // pred_fallthru
          _
      $region32: #{tpu_custom_call.1} parent=5 // pred_fallthru
        _
      %p299 = scmp.le.s32.totalorder 2, %s16
      // Predicated region
      $region45: #{tpu_custom_call.1} parent=5 // pred_check
        %p300 = pneg %p299
      $region46: #{tpu_custom_call.1} parent=5 // pred_check_branch
        %302 = sbr.rel (%p300) target = $region48
      $region47: #{tpu_custom_call.1} parent=5 // pred_region
        %s303 = ssub.s32 %s16, 2
        // Predicated region
        $region49: #{tpu_custom_call.1} parent=47 // pred_check
          %p304 = pneg %p113
        $region50: #{tpu_custom_call.1} parent=47 // pred_check_branch
          %306 = sbr.rel (%p304) target = $region52
        $region51: #{tpu_custom_call.1} parent=47 // pred_region
          %s307 = sand.u32 %s98, 1
          %s308 = scalar_lea.sflag [#allocation4], %s307
          %s309 = sand.u32 %s98, 1
          %s310 = smul.addr %s309, 8
          %s311 = scalar_lea.vmem [#allocation7], %s310
          %312 = dma.done %s308, 128
        $region52: #{tpu_custom_call.1} parent=47 // pred_fallthru
          _
      $region48: #{tpu_custom_call.1} parent=5 // pred_fallthru
        _
    $region6: #{tpu_custom_call.1} parent=1 // loop_footer
      %s20 = sadd.s32 1, %s16
    $region7: #{tpu_custom_call.1} parent=1 // loop_footer_branch
      %15 = sbr.rel target = $region3
    $region8: #{tpu_custom_call.1} parent=1 // loop_exit
      _
    %313 = vsyncpa [#allocation3], 1
    %s314 = scalar_lea.sflag [#allocation3], 1
    %315 = vsyncpa %s314, 1
    %316 = vsyncpa [#allocation6], 1
    %317 = vsyncpa [#allocation4], 1
    %s318 = scalar_lea.sflag [#allocation4], 1
    %319 = vsyncpa %s318, 1

// kernel: tpu_custom_call.1
$region0: #{tpu_custom_call.1}
  #allocation0 [shape = 'u32[]', space=smem, size = 0x4, offset = 0x4, fixed_abs, tag = 'smem constant byte address 0x4 - core index']
  #allocation1 [shape = 'u32[144,128]{1,0:T(1,128)}', space=vmem, size = 0x12000, scoped, tag = 'internal scratch']
  %s0 = inlined_call_operand.hbm [shape: bf16[16,32], index: 0, kind: input, shape index: {}]
  %s1 = inlined_call_operand.hbm [shape: bf16[32,128], index: 1, kind: input, shape index: {}]
  %s2 = inlined_call_operand.vmem [shape: f32[1,128], index: 2, kind: input, shape index: {}]
  %s3 = inlined_call_operand.hbm [shape: f32[16,128], index: 3, kind: output, shape index: {}]
  %s4 = sld [smem:[#allocation0]]
  $region53: #{tpu_custom_call.1} parent=0
    _
  %s6 = ssub.s32 1, %s4
  %s7 = scalar_select 0, %s6, %s4
  $region1: #{tpu_custom_call.1} parent=0
    #allocation2 [shape = 'u8[4096]{0}', space=vmem, size = 0x1000, scoped, tag = 'input window, operand 0']
    #allocation3 [shape = 's32[2]{0}', space=sflag, size = 0x8, scoped, tag = 'scoped memory for tpu_custom_call.1']
    #allocation4 [shape = 's32[2]{0}', space=sflag, size = 0x8, scoped, tag = 'scoped memory for tpu_custom_call.1']
    #allocation5 [shape = 'u8[8192]{0}', space=vmem, size = 0x2000, scoped, tag = 'input window, operand 1, single buffered']
    #allocation6 [shape = 's32[1]{0}', space=sflag, size = 0x4, scoped, tag = 'scoped memory for tpu_custom_call.1']
    #allocation7 [shape = 'u8[8192]{0}', space=vmem, size = 0x2000, scoped, tag = 'output window, operand 0']
    %8 = vsyncpa [#allocation3], 0
    %s9 = scalar_lea.sflag [#allocation3], 1
    %10 = vsyncpa %s9, 0
    %11 = vsyncpa [#allocation6], 0
    %12 = vsyncpa [#allocation4], 0
    %s13 = scalar_lea.sflag [#allocation4], 1
    %14 = vsyncpa %s13, 0
    loop: start=0, step=1, limit=4
    $region2: #{tpu_custom_call.1} parent=1 // loop_pre_header
      _
    $region3: #{tpu_custom_call.1} parent=1 // loop_header
      %s16 = sphi 0, %s20
      %p17 = scmp.ge.s32.totalorder %s16, 4
      %s26 = sphi 0, %s28
      %s29 = sphi 0, %s26
      %s30 = sphi 0, %s29
      %s46 = sphi 0, %s30
      %s50 = sphi 0, %s50
      %s52 = sphi 0, %s50
      %s53 = sphi 0, %s52
      %s67 = sphi 0, %s53
      %s71 = sphi 0, %s71
      %s73 = sphi 0, %s71
      %s74 = sphi 0, %s73
      %s88 = sphi 0, %s74
      %s94 = sphi 0, %s96
      %s97 = sphi 0, %s94
      %s98 = sphi 0, %s97
      %s114 = sphi 0, %s98
    $region4: #{tpu_custom_call.1} parent=1 // loop_header_branch
      %19 = sbr.rel (%p17) target = $region8
    $region5: #{tpu_custom_call.1} parent=1 // loop_body
      %s21 = ssub.s32 %s16, 1
      %s22 = ssub.s32 %s16, 2
      %s23 = sadd.s32 %s16, 1
      %s24 = ssub.s32 %s16, %s23
      %p25 = scmp.eq.s32.totalorder %s24, 0
      %s27 = sadd.s32 %s26, 1
      %s28 = scalar_select %p25, %s26, %s27
      %p31 = pneg %p25
      %p32 = scmp.eq.s32.totalorder %s16, 1
      %p33 = por %p31, %p32
      %p34 = scmp.ne.s32.totalorder %s26, %s29
      %p35 = scmp.eq.s32.totalorder %s16, 0
      %p36 = por %p34, %p35
      %p37 = scmp.ne.s32.totalorder %s26, %s29
      %p38 = scmp.eq.s32.totalorder %s21, 1
      %p39 = por %p37, %p38
      %p40 = scmp.ne.s32.totalorder %s29, %s30
      %p41 = scmp.eq.s32.totalorder %s21, 0
      %p42 = por %p40, %p41
      %p43 = scmp.ne.s32.totalorder %s29, %s30
      %p44 = scmp.eq.s32.totalorder %s22, 1
      %p45 = por %p43, %p44
      %p47 = scmp.ne.s32.totalorder %s30, %s46
      %p48 = scmp.eq.s32.totalorder %s22, 0
      %p49 = por %p47, %p48
      %s51 = sadd.s32 %s50, 1
      %p54 = scmp.eq.s32.totalorder %s16, 1
      %p55 = scmp.ne.s32.totalorder %s50, %s52
      %p56 = scmp.eq.s32.totalorder %s16, 0
      %p57 = por %p55, %p56
      %p58 = scmp.ne.s32.totalorder %s50, %s52
      %p59 = scmp.eq.s32.totalorder %s21, 1
      %p60 = por %p58, %p59
      %p61 = scmp.ne.s32.totalorder %s52, %s53
      %p62 = scmp.eq.s32.totalorder %s21, 0
      %p63 = por %p61, %p62
      %p64 = scmp.ne.s32.totalorder %s52, %s53
      %p65 = scmp.eq.s32.totalorder %s22, 1
      %p66 = por %p64, %p65
      %p68 = scmp.ne.s32.totalorder %s53, %s67
      %p69 = scmp.eq.s32.totalorder %s22, 0
      %p70 = por %p68, %p69
      %s72 = sadd.s32 %s71, 1
      %p75 = scmp.eq.s32.totalorder %s16, 1
      %p76 = scmp.ne.s32.totalorder %s71, %s73
      %p77 = scmp.eq.s32.totalorder %s16, 0
      %p78 = por %p76, %p77
      %p79 = scmp.ne.s32.totalorder %s71, %s73
      %p80 = scmp.eq.s32.totalorder %s21, 1
      %p81 = por %p79, %p80
      %p82 = scmp.ne.s32.totalorder %s73, %s74
      %p83 = scmp.eq.s32.totalorder %s21, 0
      %p84 = por %p82, %p83
      %p85 = scmp.ne.s32.totalorder %s73, %s74
      %p86 = scmp.eq.s32.totalorder %s22, 1
      %p87 = por %p85, %p86
      %p89 = scmp.ne.s32.totalorder %s74, %s88
      %p90 = scmp.eq.s32.totalorder %s22, 0
      %p91 = por %p89, %p90
      %s92 = ssub.s32 %s16, %s23
      %p93 = scmp.eq.s32.totalorder %s92, 0
      %s95 = sadd.s32 %s94, 1
      %s96 = scalar_select %p93, %s94, %s95
      %p99 = pneg %p93
      %p100 = scmp.eq.s32.totalorder %s16, 1
      %p101 = por %p99, %p100
      %p102 = scmp.ne.s32.totalorder %s94, %s97
      %p103 = scmp.eq.s32.totalorder %s16, 0
      %p104 = por %p102, %p103
      %p105 = scmp.ne.s32.totalorder %s94, %s97
      %p106 = scmp.eq.s32.totalorder %s21, 1
      %p107 = por %p105, %p106
      %p108 = scmp.ne.s32.totalorder %s97, %s98
      %p109 = scmp.eq.s32.totalorder %s21, 0
      %p110 = por %p108, %p109
      %p111 = scmp.ne.s32.totalorder %s97, %s98
      %p112 = scmp.eq.s32.totalorder %s22, 1
      %p113 = por %p111, %p112
      %p115 = scmp.ne.s32.totalorder %s98, %s114
      %p116 = scmp.eq.s32.totalorder %s22, 0
      %p117 = por %p115, %p116
      %p118 = scmp.le.s32.totalorder 1, %s16
      %p119 = scmp.lt.s32.totalorder %s16, 3
      %p120 = pnand %p118, %p119
      %p121 = pneg %p120
      // Predicated region
      $region9: #{tpu_custom_call.1} parent=5 // pred_check
        _
      $region10: #{tpu_custom_call.1} parent=5 // pred_check_branch
        %123 = sbr.rel (%p120) target = $region12
      $region11: #{tpu_custom_call.1} parent=5 // pred_region
        %s124 = ssub.s32 %s16, 1
        // Predicated region
        $region13: #{tpu_custom_call.1} parent=11 // pred_check
          %p125 = pneg %p63
        $region14: #{tpu_custom_call.1} parent=11 // pred_check_branch
          %127 = sbr.rel (%p125) target = $region16
        $region15: #{tpu_custom_call.1} parent=11 // pred_region
          %s129 = ssub.s32 256, 256
          %130 = vsyncadd [#allocation6], %s129
          %s131 = sshll.u32 [#allocation5], 4
          %s132 = int_to_ptr.vmem [resolvable:$true] %s131
          %137 = dma.hbm_to_vmem [thread:$0]  %s1, 256, %s132, [#allocation6], 64, 64, 4
        $region16: #{tpu_custom_call.1} parent=11 // pred_fallthru
          _
        // Predicated region
        $region17: #{tpu_custom_call.1} parent=11 // pred_check
          %p138 = pneg %p84
        $region18: #{tpu_custom_call.1} parent=11 // pred_check_branch
          %140 = sbr.rel (%p138) target = $region20
        $region19: #{tpu_custom_call.1} parent=11 // pred_region
          _
        $region20: #{tpu_custom_call.1} parent=11 // pred_fallthru
          _
      $region12: #{tpu_custom_call.1} parent=5 // pred_fallthru
        _
      %p141 = scmp.lt.s32.totalorder %s16, 2
      // Predicated region
      $region21: #{tpu_custom_call.1} parent=5 // pred_check
        %p142 = pneg %p141
      $region22: #{tpu_custom_call.1} parent=5 // pred_check_branch
        %144 = sbr.rel (%p142) target = $region24
      $region23: #{tpu_custom_call.1} parent=5 // pred_region
        // Predicated region
        $region25: #{tpu_custom_call.1} parent=23 // pred_check
          %p145 = pneg %p36
        $region26: #{tpu_custom_call.1} parent=23 // pred_check_branch
          %147 = sbr.rel (%p145) target = $region28
        $region27: #{tpu_custom_call.1} parent=23 // pred_region
          %s148 = sand.u32 %s26, 1
          %s149 = scalar_lea.sflag [#allocation3], %s148
          %s150 = sand.u32 %s26, 1
          %s151 = smul.addr %s150, 4
          %s152 = scalar_lea.vmem [#allocation2], %s151
          %s154 = ssub.s32 64, 64
          %155 = vsyncadd %s149, %s154
          %s156 = smul.addr %s16, 64
          %s157 = scalar_lea.hbm %s0, %s156
          %s159 = sshll.u32 %s152, 4
          %s160 = int_to_ptr.vmem [resolvable:$true] %s159
          %162 = dma.hbm_to_vmem [thread:$0]  %s157, 64, %s160, %s149
        $region28: #{tpu_custom_call.1} parent=23 // pred_fallthru
          _
      $region24: #{tpu_custom_call.1} parent=5 // pred_fallthru
        _
      %p163 = scmp.le.s32.totalorder 1, %s16
      %p164 = scmp.lt.s32.totalorder %s16, 3
      %p165 = pnand %p163, %p164
      %p166 = pneg %p165
      // Predicated region
      $region29: #{tpu_custom_call.1} parent=5 // pred_check
        _
      $region30: #{tpu_custom_call.1} parent=5 // pred_check_branch
        %168 = sbr.rel (%p165) target = $region32
      $region31: #{tpu_custom_call.1} parent=5 // pred_region
        %s169 = ssub.s32 %s16, 1
        %s170 = sand.u32 %s29, 1
        %s171 = scalar_lea.sflag [#allocation3], %s170
        %s172 = sand.u32 %s29, 1
        %s173 = smul.addr %s172, 4
        %s174 = scalar_lea.vmem [#allocation2], %s173
        // Predicated region
        $region33: #{tpu_custom_call.1} parent=31 // pred_check
          %p175 = pneg %p42
        $region34: #{tpu_custom_call.1} parent=31 // pred_check_branch
          %177 = sbr.rel (%p175) target = $region36
        $region35: #{tpu_custom_call.1} parent=31 // pred_region
          %178 = dma.done %s171, 64
        $region36: #{tpu_custom_call.1} parent=31 // pred_fallthru
          _
        // Predicated region
        $region37: #{tpu_custom_call.1} parent=31 // pred_check
          %p179 = pneg %p63
        $region38: #{tpu_custom_call.1} parent=31 // pred_check_branch
          %181 = sbr.rel (%p179) target = $region40
        $region39: #{tpu_custom_call.1} parent=31 // pred_region
          %182 = dma.done [#allocation6], 256
        $region40: #{tpu_custom_call.1} parent=31 // pred_fallthru
          _
        %s183 = sand.u32 %s29, 1
        %s184 = scalar_lea.sflag [#allocation3], %s183
        %s185 = sand.u32 %s29, 1
        %s186 = smul.addr %s185, 4
        %s187 = scalar_lea.vmem [#allocation2], %s186
        %p188 = pneg %p42
        %p189 = pneg %p39
        %p190 = pneg %p63
        %p191 = pneg %p60
        %p192 = pneg %p84
        %p193 = pneg %p81
        %p194 = pneg %p110
        %p195 = pneg %p107
        %s196 = sand.u32 %s97, 1
        %s197 = scalar_lea.sflag [#allocation4], %s196
        %s198 = sand.u32 %s97, 1
        %s199 = smul.addr %s198, 8
        %s200 = scalar_lea.vmem [#allocation7], %s199
        %v202 = vld [vmem:[%s174] sm:$0xf]
        %v203 = vld [vmem:[#allocation5] sm:$0xf]
        %v204 = vld [vmem:[#allocation5 + $0x4] sm:$0xf]
        %v205 = vld [vmem:[#allocation5 + $0x8] sm:$0xf]
        %v206 = vld [vmem:[#allocation5 + $0xc] sm:$0xf]
        %v207 = vld [vmem:[%s2] sm:$0x1]
        %v209 = vlaneseq
        %v210 = vshrl.u32 %v209, 7
        %v211 = vsub.s32 0, %v210
        %v212 = vrot.slane %v207, %v211
        %v218 = vunpack.c.l.b16 %v203
        %v219 = vunpack.c.l.b16 %v204
        %v220 = vunpack.c.l.b16 %v205
        %v221 = vunpack.c.l.b16 %v206
        %v222 = vpack.c.b16 %v219, %v218
        %v223 = vpack.c.b16 %v221, %v220
        %vm226 = vcmask 261120
        %v228 = vsel %vm226, %v202, 0
        %230 = vmatprep.subr.bf16.mxu0 0
        %231 = vmatpush1.bf16.msra.mxu0 %v222
        %232 = vmatprep.subr.bf16.mxu0 0
        %233 = vmatpush1.bf16.msra.mxu0 %v223
        %234 = vmatprep.subr.bf16.mxu0 0
        %235 = vmatpush1.bf16.msra.mxu0 0
        %236 = vmatprep.subr.bf16.mxu0 0
        %237 = vmatpush1.bf16.msra.mxu0 0
        %238 = vmatprep.subr.bf16.mxu0 0
        %239 = vmatpush1.bf16.msra.mxu0 0
        %240 = vmatprep.subr.bf16.mxu0 0
        %241 = vmatpush1.bf16.msra.mxu0 0
        %242 = vmatprep.subr.bf16.mxu0 0
        %243 = vmatpush1.bf16.msra.mxu0 0
        %244 = vmatprep.subr.bf16.mxu0 0
        %245 = vmatpush1.bf16.msra.mxu0 0
        %246 = vmatprep.subr.bf16.mxu0 0
        %247 = vmatpush1.bf16.msra.mxu0 0
        %248 = vmatprep.subr.bf16.mxu0 0
        %249 = vmatpush1.bf16.msra.mxu0 0
        %250 = vmatprep.subr.bf16.mxu0 0
        %251 = vmatpush1.bf16.msra.mxu0 0
        %252 = vmatprep.subr.bf16.mxu0 0
        %253 = vmatpush1.bf16.msra.mxu0 0
        %254 = vmatprep.subr.bf16.mxu0 0
        %255 = vmatpush1.bf16.msra.mxu0 0
        %256 = vmatprep.subr.bf16.mxu0 0
        %257 = vmatpush1.bf16.msra.mxu0 0
        %258 = vmatprep.subr.bf16.mxu0 0
        %259 = vmatpush1.bf16.msra.mxu0 0
        %260 = vmatprep.subr.bf16.mxu0 0
        %261 = vmatpush1.bf16.msra.mxu0 0
        %262 = vmatprep.mubr.bf16.mxu0 0
        %263 = vmatmul.mubr.bf16.gmra.mrb[0].mxu0 %v228
        %v264 = vpop.f32.mrb[0].mxu0
        %v265 = vadd.f32 %v212, %v264
        %v266 = vpop.f32.mrb[0].mxu0
        %v267 = vpop.f32.mrb[0].mxu0
        %v268 = vpop.f32.mrb[0].mxu0
        %269 = vdwg.mxu0
        %270 = vmax.xlane.f32.xlu0 %v265
        %v271 = vpop.xlane.xlu0 %270
        %v272 = vsub.f32 %v265, %v271
        %v273 = vmul.f32 %v272, 1.442695
        %v274 = vpow.pop %v273
        %275 = vadd.xlane.f32.xlu0 %v274
        %v276 = vpop.xlane.xlu0 %275
        %v277 = vlog2.pop %v276
        %v278 = vmul.f32 %v277, 0.6931472
        %v279 = vsub.f32 %v272, %v278
        %280 = vst [vmem:[%s200] sm:$0xff] %v279
        %s281 = sand.u32 %s97, 1
        %s282 = scalar_lea.sflag [#allocation4], %s281
        %s283 = sand.u32 %s97, 1
        %s284 = smul.addr %s283, 8
        %s285 = scalar_lea.vmem [#allocation7], %s284
        // Predicated region
        $region41: #{tpu_custom_call.1} parent=31 // pred_check
          %p286 = pneg %p107
        $region42: #{tpu_custom_call.1} parent=31 // pred_check_branch
          %288 = sbr.rel (%p286) target = $region44
        $region43: #{tpu_custom_call.1} parent=31 // pred_region
          %s290 = ssub.s32 128, 128
          %291 = vsyncadd %s282, %s290
          %s292 = smul.addr %s21, 128
          %s293 = scalar_lea.hbm %s3, %s292
          %s295 = sshll.u32 %s285, 4
          %s296 = int_to_ptr.vmem [resolvable:$true] %s295
          %298 = dma.vmem_to_hbm [thread:$0]  %s296, 128, %s293, %s282
        $region44: #{tpu_custom_call.1} parent=31 // pred_fallthru
          _
      $region32: #{tpu_custom_call.1} parent=5 // pred_fallthru
        _
      %p299 = scmp.le.s32.totalorder 2, %s16
      // Predicated region
      $region45: #{tpu_custom_call.1} parent=5 // pred_check
        %p300 = pneg %p299
      $region46: #{tpu_custom_call.1} parent=5 // pred_check_branch
        %302 = sbr.rel (%p300) target = $region48
      $region47: #{tpu_custom_call.1} parent=5 // pred_region
        %s303 = ssub.s32 %s16, 2
        // Predicated region
        $region49: #{tpu_custom_call.1} parent=47 // pred_check
          %p304 = pneg %p113
        $region50: #{tpu_custom_call.1} parent=47 // pred_check_branch
          %306 = sbr.rel (%p304) target = $region52
        $region51: #{tpu_custom_call.1} parent=47 // pred_region
          %s307 = sand.u32 %s98, 1
          %s308 = scalar_lea.sflag [#allocation4], %s307
          %s309 = sand.u32 %s98, 1
          %s310 = smul.addr %s309, 8
          %s311 = scalar_lea.vmem [#allocation7], %s310
          %312 = dma.done %s308, 128
        $region52: #{tpu_custom_call.1} parent=47 // pred_fallthru
          _
      $region48: #{tpu_custom_call.1} parent=5 // pred_fallthru
        _
    $region6: #{tpu_custom_call.1} parent=1 // loop_footer
      %s20 = sadd.s32 1, %s16
    $region7: #{tpu_custom_call.1} parent=1 // loop_footer_branch
      %15 = sbr.rel target = $region3
    $region8: #{tpu_custom_call.1} parent=1 // loop_exit
      _
    %313 = vsyncpa [#allocation3], 1
    %s314 = scalar_lea.sflag [#allocation3], 1
    %315 = vsyncpa %s314, 1
    %316 = vsyncpa [#allocation6], 1
    %317 = vsyncpa [#allocation4], 1
    %s318 = scalar_lea.sflag [#allocation4], 1
    %319 = vsyncpa %s318, 1

</llo_original>
